<compile_context>
chip_gen: v7x
topology: tpu7x:2x2x1
jax: 0.10.0
libtpu: 0.0.40
codegen_flags: <defaults>
</compile_context>

<pallas_src>
import jax
import jax.numpy as jnp
from jax import lax
from jax.experimental import pallas as pl
from jax.experimental.pallas import tpu as pltpu

EPS = 1e-12  # matches F.normalize default eps


def _round_up(x, m):
    return ((x + m - 1) // m) * m


def prompt_dist_kernel(x_ref, e_ref, d_ref):
    # x_ref: [TN, D] tile of input rows
    # e_ref: [M_pad, D] pre-normalized embed rows (resident; constant index_map)
    # d_ref: [TN, M_pad] pairwise ||x̂_i - ê_j||
    x = x_ref[...].astype(jnp.float32)
    ss = jnp.sum(x * x, axis=-1, keepdims=True)            # [TN, 1]
    # rsqrt(max(ss, eps^2)) == 1 / max(||x||, eps)  (same guard as F.normalize)
    xh = x * lax.rsqrt(jnp.maximum(ss, EPS * EPS))          # [TN, D]
    xh = xh.astype(e_ref.dtype)                             # bf16 into MXU iff embed is bf16

    # g = x̂ · êᵀ on the MXU; contract over D, no explicit transpose.
    g = lax.dot_general(
        xh, e_ref[...],
        dimension_numbers=(((1,), (1,)), ((), ())),
        preferred_element_type=jnp.float32,
    )                                                       # [TN, M_pad]

    # ||x̂ - ê||² = 2 - 2g for unit vectors; clamp rounding below 0.
    d_ref[...] = jnp.sqrt(jnp.maximum(2.0 - 2.0 * g, 0.0))


def prompt_forward(inp, embed, weight=1.0, stop=float("-inf"), block_n=512):
    """Forward pass of Prompt. `stop` only affects the backward pass (ReplaceGrad)."""
    N, D = inp.shape
    M, D2 = embed.shape
    assert D == D2

    # Normalize embed once in the wrapper (O(M*D)); keep bf16 MXU path if inputs are bf16.
    e32 = embed.astype(jnp.float32)
    e_nrm = jnp.sqrt(jnp.sum(e32 * e32, axis=-1, keepdims=True))
    eh = e32 / jnp.maximum(e_nrm, EPS)
    mxu_dtype = (
        jnp.bfloat16
        if (inp.dtype == jnp.bfloat16 and embed.dtype == jnp.bfloat16)
        else jnp.float32
    )
    eh = eh.astype(mxu_dtype)

    # Pad M to a multiple of 128: lane-dense output stores + full-width MXU RHS.
    m_pad = _round_up(M, 128)
    if m_pad != M:
        eh = jnp.pad(eh, ((0, m_pad - M), (0, 0)))

    # Row tile: large for throughput, shrunk (multiple of 8) for small N.
    bn = min(block_n, _round_up(N, 8))
    grid = (pl.cdiv(N, bn),)

    # VMEM budget with headroom (double-buffered inputs + output tile), capped
    # so it stays valid on v7x's 64 MiB physical VMEM.
    itemsize = jnp.dtype(mxu_dtype).itemsize
    vmem_bytes = 2 * (bn * D * 4 + m_pad * D * itemsize + bn * m_pad * 4) + (2 << 20)
    vmem_bytes = int(min(max(vmem_bytes, 16 << 20), 64 << 20))

    norms = pl.pallas_call(
        prompt_dist_kernel,
        out_shape=jax.ShapeDtypeStruct((N, m_pad), jnp.float32),
        grid_spec=pltpu.PrefetchScalarGridSpec(
            num_scalar_prefetch=0,
            grid=grid,
            in_specs=[
                pl.BlockSpec((bn, D), lambda i: (i, 0)),       # tile of input rows
                pl.BlockSpec((m_pad, D), lambda i: (0, 0)),    # resident normalized embed
            ],
            out_specs=pl.BlockSpec((bn, m_pad), lambda i: (i, 0)),
        ),
        compiler_params=pltpu.CompilerParams(
            dimension_semantics=("parallel",),
            vmem_limit_bytes=vmem_bytes,
        ),
    )(inp, eh)

    norms = norms[:, :M]                                     # drop padded columns

    # TODO(synk): arcsin tail kept in plain JAX (lax.asin has no guaranteed Mosaic
    # lowering); all O(N*M*D) normalize + pairwise-distance work is in the kernel.
    w = jnp.asarray(weight, jnp.float32)
    z = jnp.clip(norms * 0.5, 0.0, 1.0)                      # guard arcsin domain
    dists = 2.0 * jnp.square(jnp.arcsin(z)) * jnp.sign(w)
    return jnp.abs(w) * jnp.mean(dists)


def _reference(inp, embed, weight=1.0):
    xh = inp / jnp.maximum(jnp.linalg.norm(inp, axis=-1, keepdims=True), EPS)
    eh = embed / jnp.maximum(jnp.linalg.norm(embed, axis=-1, keepdims=True), EPS)
    n = jnp.linalg.norm(xh[:, None, :] - eh[None, :, :], axis=-1)
    d = 2.0 * jnp.square(jnp.arcsin(jnp.clip(n / 2.0, 0.0, 1.0)))
    w = jnp.asarray(weight, jnp.float32)
    return jnp.abs(w) * jnp.mean(d * jnp.sign(w))


if __name__ == "__main__":
    key = jax.random.PRNGKey(0)
    k1, k2, k3, k4 = jax.random.split(key, 4)

    # Case 1: original toy shapes (N input embeddings vs M prompt embeddings).
    N, M, D = 8, 4, 128
    inp = jax.random.normal(k1, (N, D), jnp.float32)
    embed = jax.random.normal(k2, (M, D), jnp.float32)  # deterministic "buffer"
    out = jax.block_until_ready(prompt_forward(inp, embed, weight=1.0, stop=float("-inf")))
    ref = _reference(inp, embed, weight=1.0)
    assert jnp.allclose(out, ref, rtol=1e-4, atol=1e-5), (out, ref)

    # Case 2: non-multiple-of-8 rows, padded M column path, negative weight.
    N2, M2, D2 = 20, 5, 256
    inp2 = jax.random.normal(k3, (N2, D2), jnp.float32)
    embed2 = jax.random.normal(k4, (M2, D2), jnp.float32)
    out2 = jax.block_until_ready(prompt_forward(inp2, embed2, weight=-0.5))
    ref2 = _reference(inp2, embed2, weight=-0.5)
    assert jnp.allclose(out2, ref2, rtol=1e-4, atol=1e-5), (out2, ref2)

    print("KERNEL_OK")
</pallas_src>

<mosaic_0001>
module attributes {stable_mosaic.version = 11 : i64} {
  func.func @prompt_dist_kernel(%arg0: i32, %arg1: memref<8x128xf32, #tpu.memory_space<vmem>>, %arg2: memref<128x128xf32, #tpu.memory_space<vmem>>, %arg3: memref<8x128xf32, #tpu.memory_space<vmem>>) attributes {dimension_semantics = [#tpu.dimension_semantics<parallel>], iteration_bounds = array<i64: 1>, scalar_prefetch = 0 : i64, scratch_operands = 0 : i64, tpu.core_type = #tpu.core_type<tc>, window_params = [{transform_indices = @transform_0, window_bounds = array<i64: 8, 128>}, {pipeline_mode = #tpu.pipeline_mode<synchronous>, transform_indices = @transform_1, window_bounds = array<i64: 128, 128>}, {transform_indices = @transform_2, window_bounds = array<i64: 8, 128>}]} {
    %c0 = arith.constant 0 : index
    %c0_0 = arith.constant 0 : index
    %0 = vector.load %arg1[%c0, %c0_0] : memref<8x128xf32, #tpu.memory_space<vmem>>, vector<8x128xf32>
    %1 = arith.mulf %0, %0 : vector<8x128xf32>
    %cst = arith.constant dense<0.000000e+00> : vector<8xf32>
    %2 = vector.multi_reduction <add>, %1, %cst [1] : vector<8x128xf32> to vector<8xf32>
    %3 = vector.shape_cast %2 : vector<8xf32> to vector<8x1xf32>
    %cst_1 = arith.constant 1.000000e-24 : f32
    %4 = vector.broadcast %cst_1 : f32 to vector<8x1xf32>
    %5 = arith.maximumf %3, %4 : vector<8x1xf32>
    %6 = math.rsqrt %5 : vector<8x1xf32>
    %7 = vector.broadcast %6 : vector<8x1xf32> to vector<8x128xf32>
    %8 = arith.mulf %0, %7 : vector<8x128xf32>
    %c0_2 = arith.constant 0 : index
    %c0_3 = arith.constant 0 : index
    %9 = vector.load %arg2[%c0_2, %c0_3] : memref<128x128xf32, #tpu.memory_space<vmem>>, vector<128x128xf32>
    %cst_4 = arith.constant dense<0.000000e+00> : vector<8x128xf32>
    %10 = tpu.matmul %8, %9, %cst_4 {dimension_numbers = #tpu.dot_dimension_numbers<[1], [1], [0], [0], [0, 0, 1, 0], [], []>} : vector<8x128xf32>, vector<128x128xf32>, vector<8x128xf32> -> vector<8x128xf32>
    %cst_5 = arith.constant 2.000000e+00 : f32
    %11 = vector.broadcast %cst_5 : f32 to vector<8x128xf32>
    %12 = arith.mulf %11, %10 : vector<8x128xf32>
    %cst_6 = arith.constant 2.000000e+00 : f32
    %13 = vector.broadcast %cst_6 : f32 to vector<8x128xf32>
    %14 = arith.subf %13, %12 : vector<8x128xf32>
    %cst_7 = arith.constant 0.000000e+00 : f32
    %15 = vector.broadcast %cst_7 : f32 to vector<8x128xf32>
    %16 = arith.maximumf %14, %15 : vector<8x128xf32>
    %17 = math.sqrt %16 : vector<8x128xf32>
    %c0_8 = arith.constant 0 : index
    %c0_9 = arith.constant 0 : index
    %18 = vector.load %arg3[%c0_8, %c0_9] : memref<8x128xf32, #tpu.memory_space<vmem>>, vector<8x128xf32>
    tpu.vector_store %arg3[%c0_8, %c0_9], %17 {strides = array<i32>} : memref<8x128xf32, #tpu.memory_space<vmem>>, vector<8x128xf32>,
    return
  }
  func.func @transform_0(%arg0: i32) -> (i32, i32) {
    %c0_i32 = arith.constant 0 : i32
    %c0_i32_0 = arith.constant 0 : i32
    return %arg0, %c0_i32 : i32, i32
  }
  func.func @transform_1(%arg0: i32) -> (i32, i32) {
    %c0_i32 = arith.constant 0 : i32
    %c0_i32_0 = arith.constant 0 : i32
    %c0_i32_1 = arith.constant 0 : i32
    return %c0_i32, %c0_i32_0 : i32, i32
  }
  func.func @transform_2(%arg0: i32) -> (i32, i32) {
    %c0_i32 = arith.constant 0 : i32
    %c0_i32_0 = arith.constant 0 : i32
    return %arg0, %c0_i32 : i32, i32
  }
}

</mosaic_0001>

<llo_original>
// kernel: tpu_custom_call.1
$region0: #{tpu_custom_call.1}
  #allocation0 [shape = 'u32[]', space=smem, size = 0x4, offset = 0x4, fixed_abs, tag = 'smem constant byte address 0x4 - core index']
  #allocation1 [shape = 'u32[144,128]{1,0:T(1,128)}', space=vmem, size = 0x12000, scoped, tag = 'internal scratch']
  %s0 = inlined_call_operand.hbm [shape: f32[8,128], index: 0, kind: input, shape index: {}]
  %s1 = inlined_call_operand.hbm [shape: f32[128,128], index: 1, kind: input, shape index: {}]
  %s2 = inlined_call_operand.hbm [shape: f32[8,128], index: 2, kind: output, shape index: {}]
  %s3 = sld [smem:[#allocation0]]
  $region26: #{tpu_custom_call.1} parent=0
    _
  %s5 = ssub.s32 1, %s3
  %s6 = scalar_select 0, %s5, %s3
  $region1: #{tpu_custom_call.1} parent=0
    #allocation2 [shape = 'u8[4096]{0}', space=vmem, size = 0x1000, scoped, tag = 'input window, operand 0, single buffered']
    #allocation3 [shape = 's32[1]{0}', space=sflag, size = 0x4, scoped, tag = 'scoped memory for tpu_custom_call.1']
    #allocation4 [shape = 's32[1]{0}', space=sflag, size = 0x4, scoped, tag = 'scoped memory for tpu_custom_call.1']
    #allocation5 [shape = 'u8[65536]{0}', space=vmem, size = 0x10000, scoped, tag = 'input window, operand 1, single buffered']
    #allocation6 [shape = 's32[1]{0}', space=sflag, size = 0x4, scoped, tag = 'scoped memory for tpu_custom_call.1']
    #allocation7 [shape = 'u8[4096]{0}', space=vmem, size = 0x1000, scoped, tag = 'output window, operand 0, single buffered']
    %7 = vsyncpa [#allocation3], 0
    %8 = vsyncpa [#allocation6], 0
    %9 = vsyncpa [#allocation4], 0
    // Predicated region
    $region2: #{tpu_custom_call.1} parent=1 // pred_check
      _
    $region3: #{tpu_custom_call.1} parent=1 // pred_check_branch
      %11 = sbr.rel (0) target = $region5
    $region4: #{tpu_custom_call.1} parent=1 // pred_region
      %s13 = ssub.s32 128, 128
      %14 = vsyncadd [#allocation3], %s13
      %s16 = sshll.u32 [#allocation2], 4
      %s17 = int_to_ptr.vmem [resolvable:$true] %s16
      %19 = dma.hbm_to_vmem [thread:$0]  %s0, 128, %s17, [#allocation3]
    $region5: #{tpu_custom_call.1} parent=1 // pred_fallthru
      _
    // Predicated region
    $region6: #{tpu_custom_call.1} parent=1 // pred_check
      _
    $region7: #{tpu_custom_call.1} parent=1 // pred_check_branch
      %21 = sbr.rel (0) target = $region9
    $region8: #{tpu_custom_call.1} parent=1 // pred_region
      %s23 = ssub.s32 2048, 2048
      %24 = vsyncadd [#allocation6], %s23
      %s25 = sshll.u32 [#allocation5], 4
      %s26 = int_to_ptr.vmem [resolvable:$true] %s25
      %31 = dma.hbm_to_vmem [thread:$0]  %s1, 2048, %s26, [#allocation6], 128, 128, 8
    $region9: #{tpu_custom_call.1} parent=1 // pred_fallthru
      _
    // Predicated region
    $region10: #{tpu_custom_call.1} parent=1 // pred_check
      _
    $region11: #{tpu_custom_call.1} parent=1 // pred_check_branch
      %33 = sbr.rel (0) target = $region13
    $region12: #{tpu_custom_call.1} parent=1 // pred_region
      %34 = dma.done [#allocation3], 128
    $region13: #{tpu_custom_call.1} parent=1 // pred_fallthru
      _
    // Predicated region
    $region14: #{tpu_custom_call.1} parent=1 // pred_check
      _
    $region15: #{tpu_custom_call.1} parent=1 // pred_check_branch
      %36 = sbr.rel (0) target = $region17
    $region16: #{tpu_custom_call.1} parent=1 // pred_region
      %37 = dma.done [#allocation6], 2048
    $region17: #{tpu_custom_call.1} parent=1 // pred_fallthru
      _
    %v38 = vld [vmem:[#allocation2] sm:$0xff]
    %v39 = vmul.f32 %v38, %v38
    %40 = vadd.xlane.f32.xlu0 %v39
    %v41 = vpop.xlane.xlu0 %40
    %v42 = vmax.f32 %v41, 1e-24
    %v43 = vrsqrt.pop %v42
    %v44 = vmul.f32 %v38, %v43
    %v45 = vld [vmem:[#allocation5] sm:$0xff]
    %v46 = vld [vmem:[#allocation5 + $0x8] sm:$0xff]
    %v47 = vld [vmem:[#allocation5 + $0x10] sm:$0xff]
    %v48 = vld [vmem:[#allocation5 + $0x18] sm:$0xff]
    %v49 = vld [vmem:[#allocation5 + $0x20] sm:$0xff]
    %v50 = vld [vmem:[#allocation5 + $0x28] sm:$0xff]
    %v51 = vld [vmem:[#allocation5 + $0x30] sm:$0xff]
    %v52 = vld [vmem:[#allocation5 + $0x38] sm:$0xff]
    %v53 = vld [vmem:[#allocation5 + $0x40] sm:$0xff]
    %v54 = vld [vmem:[#allocation5 + $0x48] sm:$0xff]
    %v55 = vld [vmem:[#allocation5 + $0x50] sm:$0xff]
    %v56 = vld [vmem:[#allocation5 + $0x58] sm:$0xff]
    %v57 = vld [vmem:[#allocation5 + $0x60] sm:$0xff]
    %v58 = vld [vmem:[#allocation5 + $0x68] sm:$0xff]
    %v59 = vld [vmem:[#allocation5 + $0x70] sm:$0xff]
    %v60 = vld [vmem:[#allocation5 + $0x78] sm:$0xff]
    %61 = vmatprep.subr.mxu0 0.0
    %62 = vmatpush1.xpose.msra.mxu0 %v45
    %63 = vmatprep.subr.mxu0 0.0
    %64 = vmatpush1.xpose.msra.mxu0 %v46
    %65 = vmatprep.subr.mxu0 0.0
    %66 = vmatpush1.xpose.msra.mxu0 %v47
    %67 = vmatprep.subr.mxu0 0.0
    %68 = vmatpush1.xpose.msra.mxu0 %v48
    %69 = vmatprep.subr.mxu0 0.0
    %70 = vmatpush1.xpose.msra.mxu0 %v49
    %71 = vmatprep.subr.mxu0 0.0
    %72 = vmatpush1.xpose.msra.mxu0 %v50
    %73 = vmatprep.subr.mxu0 0.0
    %74 = vmatpush1.xpose.msra.mxu0 %v51
    %75 = vmatprep.subr.mxu0 0.0
    %76 = vmatpush1.xpose.msra.mxu0 %v52
    %77 = vmatprep.subr.mxu0 0.0
    %78 = vmatpush1.xpose.msra.mxu0 %v53
    %79 = vmatprep.subr.mxu0 0.0
    %80 = vmatpush1.xpose.msra.mxu0 %v54
    %81 = vmatprep.subr.mxu0 0.0
    %82 = vmatpush1.xpose.msra.mxu0 %v55
    %83 = vmatprep.subr.mxu0 0.0
    %84 = vmatpush1.xpose.msra.mxu0 %v56
    %85 = vmatprep.subr.mxu0 0.0
    %86 = vmatpush1.xpose.msra.mxu0 %v57
    %87 = vmatprep.subr.mxu0 0.0
    %88 = vmatpush1.xpose.msra.mxu0 %v58
    %89 = vmatprep.subr.mxu0 0.0
    %90 = vmatpush1.xpose.msra.mxu0 %v59
    %91 = vmatprep.subr.mxu0 0.0
    %92 = vmatpush1.xpose.msra.mxu0 %v60
    %93 = vmatprep.subr.mxu0 0.0
    %94 = vmatpush1.xpose.msra.mxu0 0.0
    %95 = vmatprep.subr.mxu0 0.0
    %96 = vmatpush1.xpose.msra.mxu0 0.0
    %97 = vmatprep.subr.mxu0 0.0
    %98 = vmatpush1.xpose.msra.mxu0 0.0
    %99 = vmatprep.subr.mxu0 0.0
    %100 = vmatpush1.xpose.msra.mxu0 0.0
    %101 = vmatprep.subr.mxu0 0.0
    %102 = vmatpush1.xpose.msra.mxu0 0.0
    %103 = vmatprep.subr.mxu0 0.0
    %104 = vmatpush1.xpose.msra.mxu0 0.0
    %105 = vmatprep.subr.mxu0 0.0
    %106 = vmatpush1.xpose.msra.mxu0 0.0
    %107 = vmatprep.subr.mxu0 0.0
    %108 = vmatpush1.xpose.msra.mxu0 0.0
    %109 = vmatprep.subr.mxu0 0.0
    %110 = vmatpush1.xpose.msra.mxu0 0.0
    %111 = vmatprep.subr.mxu0 0.0
    %112 = vmatpush1.xpose.msra.mxu0 0.0
    %113 = vmatprep.subr.mxu0 0.0
    %114 = vmatpush1.xpose.msra.mxu0 0.0
    %115 = vmatprep.subr.mxu0 0.0
    %116 = vmatpush1.xpose.msra.mxu0 0.0
    %117 = vmatprep.subr.mxu0 0.0
    %118 = vmatpush1.xpose.msra.mxu0 0.0
    %119 = vmatprep.subr.mxu0 0.0
    %120 = vmatpush1.xpose.msra.mxu0 0.0
    %121 = vmatprep.subr.mxu0 0.0
    %122 = vmatpush1.xpose.msra.mxu0 0.0
    %123 = vmatprep.subr.mxu0 0.0
    %124 = vmatpush1.xpose.msra.mxu0 0.0
    %125 = vmatprep.mubr.f32.mxu0 0.0
    %126 = vmatmul.mubr.f32.gmra.mrb[0].mxu0 %v44
    %v127 = vpop.f32.mrb[0].mxu0
    %v128 = vadd.f32 0.0, %v127
    %v129 = vpop.f32.mrb[0].mxu0
    %130 = vdwg.mxu0
    %v131 = vmul.f32 %v128, 2.0
    %v132 = vsub.f32 2.0, %v131
    %v133 = vmax.f32 %v132, 0.0
    %v134 = vrsqrt.pop %v133
    %v135 = vmul.f32 %v133, %v134
    %vm136 = vcmp.eq.f32.partialorder %v133, inf
    %v137 = vsel %vm136, %v133, %v135
    %vm138 = vcmp.eq.f32.partialorder %v133, 0.0
    %v139 = vand.u32 %v133, 2147483648
    %v140 = vsel %vm138, %v139, %v137
    %141 = vst [vmem:[#allocation7] sm:$0xff] %v140
    // Predicated region
    $region18: #{tpu_custom_call.1} parent=1 // pred_check
      _
    $region19: #{tpu_custom_call.1} parent=1 // pred_check_branch
      %143 = sbr.rel (0) target = $region21
    $region20: #{tpu_custom_call.1} parent=1 // pred_region
      %s145 = ssub.s32 128, 128
      %146 = vsyncadd [#allocation4], %s145
      %s148 = sshll.u32 [#allocation7], 4
      %s149 = int_to_ptr.vmem [resolvable:$true] %s148
      %151 = dma.vmem_to_hbm [thread:$0]  %s149, 128, %s2, [#allocation4]
    $region21: #{tpu_custom_call.1} parent=1 // pred_fallthru
      _
    // Predicated region
    $region22: #{tpu_custom_call.1} parent=1 // pred_check
      _
    $region23: #{tpu_custom_call.1} parent=1 // pred_check_branch
      %153 = sbr.rel (0) target = $region25
    $region24: #{tpu_custom_call.1} parent=1 // pred_region
      %154 = dma.done [#allocation4], 128
    $region25: #{tpu_custom_call.1} parent=1 // pred_fallthru
      _
    %155 = vsyncpa [#allocation3], 1
    %156 = vsyncpa [#allocation6], 1
    %157 = vsyncpa [#allocation4], 1

</llo_original>
